<compile_context>
chip_gen: v5e
topology: v5e:2x2
jax: 0.10.0
libtpu: 0.0.40
codegen_flags: <defaults>
</compile_context>

<pallas_src>
import functools
from math import exp

import jax
import jax.numpy as jnp
from jax.experimental import pallas as pl
from jax.experimental.pallas import tpu as pltpu

LANE = 128
SUBLANE = 8


def _round_up(x, m):
    return ((x + m - 1) // m) * m


def _cdiv(a, b):
    return -(-a // b)


def _softplus(x):
    # Matches torch.nn.Softplus(beta=1, threshold=20): identity where x > 20.
    return jnp.where(x > 20.0, x, jnp.log1p(jnp.exp(jnp.minimum(x, 20.0))))


def _row_granularity(dtype):
    # Sublane packing: f32 -> 8 rows per (8,128) tile, bf16 -> 16, int8/fp8 -> 32.
    return SUBLANE * max(1, 4 // jnp.dtype(dtype).itemsize)


def _vmem_capacity_bytes():
    try:
        cap = getattr(pltpu.get_tpu_info(), "vmem_capacity_bytes", None)
        if cap:
            return int(cap)
    except Exception:
        pass
    return 128 * 1024 * 1024  # conservative fallback (v5e/v6e physical VMEM)


def _batch_tiling(batch, max_tile_b, row_gran):
    """Pick (tile_b, batch_pad) with minimal padding waste and >=2 grid steps
    whenever the batch is big enough (so v7x can shard the batch axis across
    both TensorCores)."""
    b_min = _round_up(batch, row_gran)
    max_tile_b = _round_up(max_tile_b, row_gran)
    if b_min <= row_gran:
        return b_min, b_min
    n_tiles = max(2, _cdiv(b_min, max_tile_b))
    tile_b = min(max_tile_b, _round_up(_cdiv(b_min, n_tiles), row_gran))
    batch_pad = n_tiles * tile_b
    return tile_b, batch_pad


# ---------------------------------------------------------------------------
# One-time parameter repacking (host side, OUTSIDE the per-call jit path).
# ---------------------------------------------------------------------------
def pack_params(params, compute_dtype=jnp.bfloat16):
    """Pad all weights/biases to lane multiples and fuse the mu/std heads into a
    single (k_last, round_up(2*action_dim, 128)) matrix. Run once, reuse.

    params: dict with
        'hidden': list of (W_i (in,out), b_i (out,) or (1,out))
        'mu':     (W_mu (k,A), b_mu)
        'std':    (W_std (k,A), b_std)
    """
    def as_bias(b):
        return jnp.asarray(b, jnp.float32).reshape(1, -1)

    def pad2(x, rows, cols, dtype):
        x = jnp.asarray(x)
        return jnp.pad(x, ((0, rows - x.shape[0]), (0, cols - x.shape[1]))).astype(dtype)

    hidden = params["hidden"]
    w_mu, b_mu = params["mu"]
    w_std, b_std = params["std"]
    action_dim = w_mu.shape[1]

    obs_dim = hidden[0][0].shape[0] if hidden else w_mu.shape[0]
    obs_pad = _round_up(obs_dim, LANE)
    hid_pads = [_round_up(w.shape[1], LANE) for (w, _) in hidden]
    in_pads = [obs_pad] + hid_pads[:-1]

    packed_hidden = []
    for (w, b), ip, op in zip(hidden, in_pads, hid_pads):
        packed_hidden.append((pad2(w, ip, op, compute_dtype),
                              pad2(as_bias(b), 1, op, jnp.float32)))

    k_last = hid_pads[-1] if hidden else obs_pad
    head_cols = _round_up(2 * action_dim, LANE)
    w_head = jnp.concatenate([jnp.asarray(w_mu), jnp.asarray(w_std)], axis=1)
    b_head = jnp.concatenate([as_bias(b_mu), as_bias(b_std)], axis=1)
    w_head = pad2(w_head, k_last, head_cols, compute_dtype)
    b_head = pad2(b_head, 1, head_cols, jnp.float32)

    return {"hidden": packed_hidden, "head": (w_head, b_head)}


# ---------------------------------------------------------------------------
# Kernel
# ---------------------------------------------------------------------------
def _make_kernel(num_hidden_layers, action_dim, log_sigma_min, log_sigma_max,
                 compute_dtype):
    """Kernel for a fixed number of hidden (Linear+ReLU) layers + fused head."""

    def kernel(*refs):
        # refs layout:
        #   obs_ref,
        #   [w_i, b_i] * num_hidden_layers,   (weights bf16, biases f32)
        #   w_head, b_head,                   (fused [mu | std] head, lane-dense)
        #   out_ref                           (tile_b, head_cols)
        obs_ref = refs[0]
        idx = 1
        h = obs_ref[...].astype(compute_dtype)

        # Hidden trunk: Linear (MXU, bf16 operands, f32 acc) -> bias -> ReLU (f32)
        for _ in range(num_hidden_layers):
            w_ref, b_ref = refs[idx], refs[idx + 1]
            idx += 2
            z = jnp.dot(h, w_ref[...], preferred_element_type=jnp.float32)
            z = z + b_ref[...]
            h = jnp.maximum(z, 0.0).astype(compute_dtype)

        w_head_ref, b_head_ref, out_ref = refs[idx], refs[idx + 1], refs[idx + 2]

        # Fused mu/std head: one MXU pass over h, single lane-dense output slab.
        head = jnp.dot(h, w_head_ref[...], preferred_element_type=jnp.float32)
        head = head + b_head_ref[...]

        # Softplus + clamp only on std lanes (lane >= action_dim); mu lanes pass
        # through. Padding lanes (>= 2*action_dim) are discarded in the wrapper.
        std = _softplus(head)
        if (log_sigma_min is not None) and (log_sigma_max is not None):
            std = jnp.clip(std, exp(log_sigma_min), exp(log_sigma_max))
        lane = jax.lax.broadcasted_iota(jnp.int32, head.shape, 1)
        out_ref[...] = jnp.where(lane >= action_dim, std, head).astype(out_ref.dtype)

    return kernel


# ---------------------------------------------------------------------------
# Forward wrapper (only `obs` is padded per call; weights are prepacked).
# ---------------------------------------------------------------------------
def amortised_gauss_net_forward(obs, packed, *, action_dim,
                                log_sigma_min=None, log_sigma_max=None,
                                compute_dtype=jnp.bfloat16,
                                out_dtype=jnp.float32,
                                max_tile_b=512):
    """Returns (mu, std), both `out_dtype` of shape (batch, action_dim)."""
    hidden = packed["hidden"]
    w_head, b_head = packed["head"]

    batch, obs_dim = obs.shape
    obs_pad = hidden[0][0].shape[0] if hidden else w_head.shape[0]
    k_last = w_head.shape[0]
    head_cols = w_head.shape[1]

    row_gran = _row_granularity(compute_dtype)
    tile_b, batch_pad = _batch_tiling(batch, max_tile_b, row_gran)
    grid = (batch_pad // tile_b,)

    # Only per-call tensor work: pad + cast obs (fused into the pallas_call via
    # allow_input_fusion below).
    obs_p = jnp.pad(obs, ((0, batch_pad - batch),
                          (0, obs_pad - obs_dim))).astype(compute_dtype)

    def resident(shape):
        # Same block every grid step -> stays VMEM-resident across the grid.
        return pl.BlockSpec(shape, lambda i: (0, 0))

    inputs = [obs_p]
    in_specs = [pl.BlockSpec((tile_b, obs_pad), lambda i: (i, 0))]
    for (w, b) in hidden:
        inputs += [w, b]
        in_specs += [resident(w.shape), resident(b.shape)]
    inputs += [w_head, b_head]
    in_specs += [resident(w_head.shape), resident(b_head.shape)]

    out_spec = pl.BlockSpec((tile_b, head_cols), lambda i: (i, 0))
    out_shape = jax.ShapeDtypeStruct((batch_pad, head_cols), out_dtype)

    # ---- cost estimate + VMEM budget --------------------------------------
    flops = 2 * batch_pad * (
        sum(int(w.shape[0]) * int(w.shape[1]) for (w, _) in hidden)
        + k_last * head_cols)
    transcendentals = 2 * batch_pad * head_cols          # exp + log1p in softplus
    weight_bytes = sum(int(x.size) * x.dtype.itemsize for x in inputs[1:])
    out_bytes = batch_pad * head_cols * jnp.dtype(out_dtype).itemsize
    obs_bytes = int(obs_p.size) * obs_p.dtype.itemsize
    bytes_accessed = obs_bytes + weight_bytes + out_bytes

    itemsize_c = jnp.dtype(compute_dtype).itemsize
    max_feat = max([obs_pad, head_cols] + [int(w.shape[1]) for (w, _) in hidden])
    tile_bytes = 2 * (tile_b * obs_pad * itemsize_c
                      + tile_b * head_cols * jnp.dtype(out_dtype).itemsize)
    act_bytes = 2 * tile_b * max_feat * 4
    need = weight_bytes + tile_bytes + act_bytes
    vmem_cap = (_vmem_capacity_bytes() * 3) // 4   # leave headroom for Mosaic scratch
    vmem_limit = int(min(vmem_cap, max((need * 5) // 4, 4 * 1024 * 1024)))

    kernel = _make_kernel(len(hidden), action_dim, log_sigma_min, log_sigma_max,
                          compute_dtype)

    out = pl.pallas_call(
        kernel,
        grid=grid,
        in_specs=in_specs,
        out_specs=out_spec,
        out_shape=out_shape,
        compiler_params=pltpu.CompilerParams(
            dimension_semantics=("parallel",),   # batch axis sharded across TCs on v7x
            vmem_limit_bytes=vmem_limit,
            allow_input_fusion=[True] + [False] * (len(inputs) - 1),
        ),
        cost_estimate=pl.CostEstimate(
            flops=int(flops),
            transcendentals=int(transcendentals),
            bytes_accessed=int(bytes_accessed),
        ),
    )(*inputs)

    mu = out[:batch, :action_dim]
    std = out[:batch, action_dim:2 * action_dim]
    return mu, std


# ---------------------------------------------------------------------------
# Synthetic params + pure-JAX reference
# ---------------------------------------------------------------------------
def init_params(key, obs_dim, hiddens, action_dim):
    """Deterministic synthetic init (PyTorch-Linear-like fan_in scaling).
    Weights stored as (in, out)."""
    params = {"hidden": []}
    dims = [obs_dim] + list(hiddens)
    for i in range(len(hiddens)):
        key, kw, kb = jax.random.split(key, 3)
        bound = 1.0 / (dims[i] ** 0.5)
        w = jax.random.uniform(kw, (dims[i], dims[i + 1]), jnp.float32, -bound, bound)
        b = jax.random.uniform(kb, (1, dims[i + 1]), jnp.float32, -bound, bound)
        params["hidden"].append((w, b))
    for name in ("mu", "std"):
        key, kw, kb = jax.random.split(key, 3)
        bound = 1.0 / (hiddens[-1] ** 0.5)
        w = jax.random.uniform(kw, (hiddens[-1], action_dim), jnp.float32, -bound, bound)
        b = jax.random.uniform(kb, (1, action_dim), jnp.float32, -bound, bound)
        params[name] = (w, b)
    return params


def reference_forward(obs, params, log_sigma_min=None, log_sigma_max=None,
                      compute_dtype=jnp.bfloat16):
    """Pure-JAX reference mirroring the kernel numerics (bf16 MXU operands,
    f32 accumulation and f32 elementwise math)."""
    h = obs.astype(compute_dtype)
    for (w, b) in params["hidden"]:
        z = jnp.dot(h, w.astype(compute_dtype),
                    preferred_element_type=jnp.float32) + b
        h = jnp.maximum(z, 0.0).astype(compute_dtype)
    mu = jnp.dot(h, params["mu"][0].astype(compute_dtype),
                 preferred_element_type=jnp.float32) + params["mu"][1]
    s = jnp.dot(h, params["std"][0].astype(compute_dtype),
                preferred_element_type=jnp.float32) + params["std"][1]
    std = jnp.where(s > 20.0, s, jnp.log1p(jnp.exp(jnp.minimum(s, 20.0))))
    if (log_sigma_min is not None) and (log_sigma_max is not None):
        std = jnp.clip(std, exp(log_sigma_min), exp(log_sigma_max))
    return mu, std


if __name__ == "__main__":
    # Small shapes consistent with the module: obs -> MLP(hiddens) -> (mu, std).
    obs_dim = 16
    hiddens = [32, 32]
    action_dim = 8
    log_sigma_min, log_sigma_max = -5.0, 2.0

    key = jax.random.PRNGKey(0)
    params = init_params(key, obs_dim, hiddens, action_dim)
    packed = pack_params(params)          # one-time host-side repack

    fwd = jax.jit(
        functools.partial(
            amortised_gauss_net_forward,
            action_dim=action_dim,
            log_sigma_min=log_sigma_min,
            log_sigma_max=log_sigma_max,
        )
    )

    ok = True
    # Two batch sizes: tiny (single tile) and ragged (multi-tile grid path).
    for batch in (8, 37):
        key, k_obs = jax.random.split(key)
        obs = jax.random.normal(k_obs, (batch, obs_dim), jnp.float32)

        mu, std = fwd(obs, packed)
        jax.block_until_ready((mu, std))

        mu_ref, std_ref = reference_forward(
            obs, params, log_sigma_min=log_sigma_min, log_sigma_max=log_sigma_max)

        ok &= mu.shape == (batch, action_dim) and std.shape == (batch, action_dim)
        ok &= bool(jnp.allclose(mu, mu_ref, atol=2e-4, rtol=2e-3))
        ok &= bool(jnp.allclose(std, std_ref, atol=2e-4, rtol=2e-3))
        ok &= bool(jnp.all(std >= exp(log_sigma_min) - 1e-6))
        ok &= bool(jnp.all(std <= exp(log_sigma_max) + 1e-6))
        ok &= bool(jnp.all(jnp.isfinite(mu))) and bool(jnp.all(jnp.isfinite(std)))

    assert ok, "kernel/reference mismatch"
    print("KERNEL_OK")
</pallas_src>

<mosaic_0001>
module attributes {stable_mosaic.version = 11 : i64} {
  func.func @kernel(%arg0: i32, %arg1: memref<16x128xbf16, #tpu.memory_space<vmem>>, %arg2: memref<128x128xbf16, #tpu.memory_space<vmem>>, %arg3: memref<1x128xf32, #tpu.memory_space<vmem>>, %arg4: memref<128x128xbf16, #tpu.memory_space<vmem>>, %arg5: memref<1x128xf32, #tpu.memory_space<vmem>>, %arg6: memref<128x128xbf16, #tpu.memory_space<vmem>>, %arg7: memref<1x128xf32, #tpu.memory_space<vmem>>, %arg8: memref<16x128xf32, #tpu.memory_space<vmem>>) attributes {dimension_semantics = [#tpu.dimension_semantics<parallel>], iteration_bounds = array<i64: 1>, scalar_prefetch = 0 : i64, scratch_operands = 0 : i64, tpu.core_type = #tpu.core_type<tc>, window_params = [{transform_indices = @transform_0, window_bounds = array<i64: 16, 128>}, {pipeline_mode = #tpu.pipeline_mode<synchronous>, transform_indices = @transform_1, window_bounds = array<i64: 128, 128>}, {pipeline_mode = #tpu.pipeline_mode<synchronous>, transform_indices = @transform_2, window_bounds = array<i64: 1, 128>}, {pipeline_mode = #tpu.pipeline_mode<synchronous>, transform_indices = @transform_3, window_bounds = array<i64: 128, 128>}, {pipeline_mode = #tpu.pipeline_mode<synchronous>, transform_indices = @transform_4, window_bounds = array<i64: 1, 128>}, {pipeline_mode = #tpu.pipeline_mode<synchronous>, transform_indices = @transform_5, window_bounds = array<i64: 128, 128>}, {pipeline_mode = #tpu.pipeline_mode<synchronous>, transform_indices = @transform_6, window_bounds = array<i64: 1, 128>}, {transform_indices = @transform_7, window_bounds = array<i64: 16, 128>}]} {
    %c0 = arith.constant 0 : index
    %c0_0 = arith.constant 0 : index
    %0 = vector.load %arg1[%c0, %c0_0] : memref<16x128xbf16, #tpu.memory_space<vmem>>, vector<16x128xbf16>
    %c0_1 = arith.constant 0 : index
    %c0_2 = arith.constant 0 : index
    %1 = vector.load %arg2[%c0_1, %c0_2] : memref<128x128xbf16, #tpu.memory_space<vmem>>, vector<128x128xbf16>
    %cst = arith.constant dense<0.000000e+00> : vector<16x128xf32>
    %2 = tpu.matmul %0, %1, %cst {dimension_numbers = #tpu.dot_dimension_numbers<[1], [0], [0], [1], [0, 0, 1, 1], [], []>} : vector<16x128xbf16>, vector<128x128xbf16>, vector<16x128xf32> -> vector<16x128xf32>
    %c0_3 = arith.constant 0 : index
    %c0_4 = arith.constant 0 : index
    %3 = vector.load %arg3[%c0_3, %c0_4] : memref<1x128xf32, #tpu.memory_space<vmem>>, vector<1x128xf32>
    %4 = vector.broadcast %3 : vector<1x128xf32> to vector<16x128xf32>
    %5 = arith.addf %2, %4 : vector<16x128xf32>
    %cst_5 = arith.constant 0.000000e+00 : f32
    %6 = vector.broadcast %cst_5 : f32 to vector<16x128xf32>
    %7 = arith.maximumf %5, %6 : vector<16x128xf32>
    %8 = arith.truncf %7 : vector<16x128xf32> to vector<16x128xbf16>
    %c0_6 = arith.constant 0 : index
    %c0_7 = arith.constant 0 : index
    %9 = vector.load %arg4[%c0_6, %c0_7] : memref<128x128xbf16, #tpu.memory_space<vmem>>, vector<128x128xbf16>
    %cst_8 = arith.constant dense<0.000000e+00> : vector<16x128xf32>
    %10 = tpu.matmul %8, %9, %cst_8 {dimension_numbers = #tpu.dot_dimension_numbers<[1], [0], [0], [1], [0, 0, 1, 1], [], []>} : vector<16x128xbf16>, vector<128x128xbf16>, vector<16x128xf32> -> vector<16x128xf32>
    %c0_9 = arith.constant 0 : index
    %c0_10 = arith.constant 0 : index
    %11 = vector.load %arg5[%c0_9, %c0_10] : memref<1x128xf32, #tpu.memory_space<vmem>>, vector<1x128xf32>
    %12 = vector.broadcast %11 : vector<1x128xf32> to vector<16x128xf32>
    %13 = arith.addf %10, %12 : vector<16x128xf32>
    %cst_11 = arith.constant 0.000000e+00 : f32
    %14 = vector.broadcast %cst_11 : f32 to vector<16x128xf32>
    %15 = arith.maximumf %13, %14 : vector<16x128xf32>
    %16 = arith.truncf %15 : vector<16x128xf32> to vector<16x128xbf16>
    %c0_12 = arith.constant 0 : index
    %c0_13 = arith.constant 0 : index
    %17 = vector.load %arg6[%c0_12, %c0_13] : memref<128x128xbf16, #tpu.memory_space<vmem>>, vector<128x128xbf16>
    %cst_14 = arith.constant dense<0.000000e+00> : vector<16x128xf32>
    %18 = tpu.matmul %16, %17, %cst_14 {dimension_numbers = #tpu.dot_dimension_numbers<[1], [0], [0], [1], [0, 0, 1, 1], [], []>} : vector<16x128xbf16>, vector<128x128xbf16>, vector<16x128xf32> -> vector<16x128xf32>
    %c0_15 = arith.constant 0 : index
    %c0_16 = arith.constant 0 : index
    %19 = vector.load %arg7[%c0_15, %c0_16] : memref<1x128xf32, #tpu.memory_space<vmem>>, vector<1x128xf32>
    %20 = vector.broadcast %19 : vector<1x128xf32> to vector<16x128xf32>
    %21 = arith.addf %18, %20 : vector<16x128xf32>
    %cst_17 = arith.constant 2.000000e+01 : f32
    %22 = vector.broadcast %cst_17 : f32 to vector<16x128xf32>
    %23 = arith.cmpf ogt, %21, %22 : vector<16x128xf32>
    %cst_18 = arith.constant 2.000000e+01 : f32
    %24 = vector.broadcast %cst_18 : f32 to vector<16x128xf32>
    %25 = arith.minimumf %21, %24 : vector<16x128xf32>
    %26 = math.exp %25 : vector<16x128xf32>
    %27 = math.log1p %26 : vector<16x128xf32>
    %28 = arith.select %23, %21, %27 : vector<16x128xi1>, vector<16x128xf32>
    %cst_19 = arith.constant 0.006737947 : f32
    %cst_20 = arith.constant 7.3890562 : f32
    %29 = vector.broadcast %cst_19 : f32 to vector<16x128xf32>
    %30 = arith.maximumf %29, %28 : vector<16x128xf32>
    %31 = vector.broadcast %cst_20 : f32 to vector<16x128xf32>
    %32 = arith.minimumf %31, %30 : vector<16x128xf32>
    %33 = tpu.iota {dimensions = array<i32: 1>} : vector<16x128xi32>
    %c8_i32 = arith.constant 8 : i32
    %34 = vector.broadcast %c8_i32 : i32 to vector<16x128xi32>
    %35 = arith.cmpi sge, %33, %34 : vector<16x128xi32>
    %36 = arith.select %35, %32, %21 : vector<16x128xi1>, vector<16x128xf32>
    %c0_21 = arith.constant 0 : index
    %c0_22 = arith.constant 0 : index
    %37 = vector.load %arg8[%c0_21, %c0_22] : memref<16x128xf32, #tpu.memory_space<vmem>>, vector<16x128xf32>
    tpu.vector_store %arg8[%c0_21, %c0_22], %36 {strides = array<i32>} : memref<16x128xf32, #tpu.memory_space<vmem>>, vector<16x128xf32>,
    return
  }
  func.func @transform_0(%arg0: i32) -> (i32, i32) {
    %c0_i32 = arith.constant 0 : i32
    %c0_i32_0 = arith.constant 0 : i32
    return %arg0, %c0_i32 : i32, i32
  }
  func.func @transform_1(%arg0: i32) -> (i32, i32) {
    %c0_i32 = arith.constant 0 : i32
    %c0_i32_0 = arith.constant 0 : i32
    %c0_i32_1 = arith.constant 0 : i32
    return %c0_i32, %c0_i32_0 : i32, i32
  }
  func.func @transform_2(%arg0: i32) -> (i32, i32) {
    %c0_i32 = arith.constant 0 : i32
    %c0_i32_0 = arith.constant 0 : i32
    %c0_i32_1 = arith.constant 0 : i32
    return %c0_i32, %c0_i32_0 : i32, i32
  }
  func.func @transform_3(%arg0: i32) -> (i32, i32) {
    %c0_i32 = arith.constant 0 : i32
    %c0_i32_0 = arith.constant 0 : i32
    %c0_i32_1 = arith.constant 0 : i32
    return %c0_i32, %c0_i32_0 : i32, i32
  }
  func.func @transform_4(%arg0: i32) -> (i32, i32) {
    %c0_i32 = arith.constant 0 : i32
    %c0_i32_0 = arith.constant 0 : i32
    %c0_i32_1 = arith.constant 0 : i32
    return %c0_i32, %c0_i32_0 : i32, i32
  }
  func.func @transform_5(%arg0: i32) -> (i32, i32) {
    %c0_i32 = arith.constant 0 : i32
    %c0_i32_0 = arith.constant 0 : i32
    %c0_i32_1 = arith.constant 0 : i32
    return %c0_i32, %c0_i32_0 : i32, i32
  }
  func.func @transform_6(%arg0: i32) -> (i32, i32) {
    %c0_i32 = arith.constant 0 : i32
    %c0_i32_0 = arith.constant 0 : i32
    %c0_i32_1 = arith.constant 0 : i32
    return %c0_i32, %c0_i32_0 : i32, i32
  }
  func.func @transform_7(%arg0: i32) -> (i32, i32) {
    %c0_i32 = arith.constant 0 : i32
    %c0_i32_0 = arith.constant 0 : i32
    return %arg0, %c0_i32 : i32, i32
  }
}

</mosaic_0001>

<llo_original>
// kernel: amortised_gauss_net_forward.2
$region0: #{amortised_gauss_net_forward.2}
  #allocation0 [shape = 'u32[]', space=smem, size = 0x4, offset = 0x4, fixed_abs, tag = 'smem constant byte address 0x4 - core index']
  #allocation1 [shape = 'u32[72,128]{1,0:T(1,128)}', space=vmem, size = 0x9000, scoped, tag = 'internal scratch']
  #allocation2 [shape = 'u32[2048]{0}', space=vmem, size = 0x2000, scoped, tag = 'scoped memory for amortised_gauss_net_forward.2']
  #allocation3 [shape = 'u32[2048]{0}', space=vmem, size = 0x2000, scoped, tag = 'scoped memory for amortised_gauss_net_forward.2']
  #allocation4 [shape = 'u32[2048]{0}', space=vmem, size = 0x2000, scoped, tag = 'scoped memory for amortised_gauss_net_forward.2']
  #allocation5 [shape = 'u32[2048]{0}', space=vmem, size = 0x2000, scoped, tag = 'scoped memory for amortised_gauss_net_forward.2']
  #allocation6 [shape = 'u32[2048]{0}', space=vmem, size = 0x2000, scoped, tag = 'scoped memory for amortised_gauss_net_forward.2']
  %s0 = inlined_call_operand.hbm [shape: bf16[128,128], index: 0, kind: input, shape index: {}]
  %s1 = inlined_call_operand.vmem [shape: f32[1,128], index: 1, kind: input, shape index: {}]
  %s2 = inlined_call_operand.hbm [shape: bf16[128,128], index: 2, kind: input, shape index: {}]
  %s3 = inlined_call_operand.vmem [shape: f32[1,128], index: 3, kind: input, shape index: {}]
  %s4 = inlined_call_operand.hbm [shape: bf16[128,128], index: 4, kind: input, shape index: {}]
  %s5 = inlined_call_operand.vmem [shape: f32[1,128], index: 5, kind: input, shape index: {}]
  %s6 = inlined_call_operand.vmem [shape: bf16[8,16], index: 6, kind: input, shape index: {}]
  %s7 = inlined_call_operand.<no memory space> [shape: bf16[], index: 7, kind: input, shape index: {}]
  %s8 = inlined_call_operand.vmem [shape: f32[16,128], index: 8, kind: output, shape index: {}]
  %s9 = sld [smem:[#allocation0]]
  $region50: #{amortised_gauss_net_forward.2} parent=0
    _
  %s11 = ssub.s32 1, %s9
  %s12 = scalar_select 0, %s11, %s9
  %v13 = vstv %s7
  %v14 = vunpack.i.l.bf16 %v13
  %v16 = vunpack.i.h.bf16 %v13
  $region1: #{amortised_gauss_net_forward.2} parent=0
    #allocation7 [shape = 'u8[32768]{0}', space=vmem, size = 0x8000, scoped, tag = 'input window, operand 1, single buffered']
    #allocation8 [shape = 's32[1]{0}', space=sflag, size = 0x4, scoped, tag = 'scoped memory for amortised_gauss_net_forward.2']
    #allocation9 [shape = 'u8[32768]{0}', space=vmem, size = 0x8000, scoped, tag = 'input window, operand 3, single buffered']
    #allocation10 [shape = 's32[1]{0}', space=sflag, size = 0x4, scoped, tag = 'scoped memory for amortised_gauss_net_forward.2']
    #allocation11 [shape = 'u8[32768]{0}', space=vmem, size = 0x8000, scoped, tag = 'input window, operand 5, single buffered']
    #allocation12 [shape = 'u8[4096]{0}', space=vmem, size = 0x1000, dematerialized = true, scoped, tag = 'FusionAdapter Buffer %fusion.1 = bf16[16,128]{1,0:T(8,128)(2,1)} fusion(%param_6.1, %param_7), kind=kLoop, calls=%fused_computation.1.clone, metadata={op_name="jit(amortised_gauss_net_forward)/jit(_pad)/pad" stack_frame_id=1}']
    %18 = vsyncpa [#allocation8], 0
    %19 = vsyncpa [#allocation10], 0
    // Predicated region
    $region2: #{amortised_gauss_net_forward.2} parent=1 // pred_check
      _
    $region3: #{amortised_gauss_net_forward.2} parent=1 // pred_check_branch
      %21 = sbr.rel (0) target = $region5
    $region4: #{amortised_gauss_net_forward.2} parent=1 // pred_region
      _
    $region5: #{amortised_gauss_net_forward.2} parent=1 // pred_fallthru
      _
    // Predicated region
    $region6: #{amortised_gauss_net_forward.2} parent=1 // pred_check
      _
    $region7: #{amortised_gauss_net_forward.2} parent=1 // pred_check_branch
      %23 = sbr.rel (0) target = $region9
    $region8: #{amortised_gauss_net_forward.2} parent=1 // pred_region
      %25 = vsyncadd [#allocation8], 0
      %s26 = sshll.u32 %s0, 4
      %s27 = int_to_ptr.hbm [resolvable:$true] %s26
      %s28 = sshll.u32 [#allocation7], 4
      %s29 = int_to_ptr.vmem [resolvable:$true] %s28
      %34 = dma.hbm_to_vmem [thread:$0]  %s27, 1024, %s29, [#allocation8], 64, 64, 4
    $region9: #{amortised_gauss_net_forward.2} parent=1 // pred_fallthru
      _
    // Predicated region
    $region10: #{amortised_gauss_net_forward.2} parent=1 // pred_check
      _
    $region11: #{amortised_gauss_net_forward.2} parent=1 // pred_check_branch
      %36 = sbr.rel (0) target = $region13
    $region12: #{amortised_gauss_net_forward.2} parent=1 // pred_region
      _
    $region13: #{amortised_gauss_net_forward.2} parent=1 // pred_fallthru
      _
    // Predicated region
    $region14: #{amortised_gauss_net_forward.2} parent=1 // pred_check
      _
    $region15: #{amortised_gauss_net_forward.2} parent=1 // pred_check_branch
      %38 = sbr.rel (0) target = $region17
    $region16: #{amortised_gauss_net_forward.2} parent=1 // pred_region
      %40 = vsyncadd [#allocation10], 0
      %s41 = sshll.u32 %s2, 4
      %s42 = int_to_ptr.hbm [resolvable:$true] %s41
      %s43 = sshll.u32 [#allocation9], 4
      %s44 = int_to_ptr.vmem [resolvable:$true] %s43
      %49 = dma.hbm_to_vmem [thread:$0]  %s42, 1024, %s44, [#allocation10], 64, 64, 4
    $region17: #{amortised_gauss_net_forward.2} parent=1 // pred_fallthru
      _
    // Predicated region
    $region18: #{amortised_gauss_net_forward.2} parent=1 // pred_check
      _
    $region19: #{amortised_gauss_net_forward.2} parent=1 // pred_check_branch
      %51 = sbr.rel (0) target = $region21
    $region20: #{amortised_gauss_net_forward.2} parent=1 // pred_region
      _
    $region21: #{amortised_gauss_net_forward.2} parent=1 // pred_fallthru
      _
    // Predicated region
    $region22: #{amortised_gauss_net_forward.2} parent=1 // pred_check
      _
    $region23: #{amortised_gauss_net_forward.2} parent=1 // pred_check_branch
      %53 = sbr.rel (0) target = $region25
    $region24: #{amortised_gauss_net_forward.2} parent=1 // pred_region
      %55 = vsyncadd [#allocation10], 0
      %s56 = sshll.u32 %s4, 4
      %s57 = int_to_ptr.hbm [resolvable:$true] %s56
      %s58 = sshll.u32 [#allocation11], 4
      %s59 = int_to_ptr.vmem [resolvable:$true] %s58
      %64 = dma.hbm_to_vmem [thread:$0]  %s57, 1024, %s59, [#allocation10], 64, 64, 4
    $region25: #{amortised_gauss_net_forward.2} parent=1 // pred_fallthru
      _
    // Predicated region
    $region26: #{amortised_gauss_net_forward.2} parent=1 // pred_check
      _
    $region27: #{amortised_gauss_net_forward.2} parent=1 // pred_check_branch
      %66 = sbr.rel (0) target = $region29
    $region28: #{amortised_gauss_net_forward.2} parent=1 // pred_region
      _
    $region29: #{amortised_gauss_net_forward.2} parent=1 // pred_fallthru
      _
    // Predicated region
    $region30: #{amortised_gauss_net_forward.2} parent=1 // pred_check
      _
    $region31: #{amortised_gauss_net_forward.2} parent=1 // pred_check_branch
      %68 = sbr.rel (0) target = $region33
    $region32: #{amortised_gauss_net_forward.2} parent=1 // pred_region
      %70 = dma.done [#allocation8], 1024
    $region33: #{amortised_gauss_net_forward.2} parent=1 // pred_fallthru
      _
    // Predicated region
    $region34: #{amortised_gauss_net_forward.2} parent=1 // pred_check
      _
    $region35: #{amortised_gauss_net_forward.2} parent=1 // pred_check_branch
      %72 = sbr.rel (0) target = $region37
    $region36: #{amortised_gauss_net_forward.2} parent=1 // pred_region
      %74 = dma.done [#allocation10], 1024
    $region37: #{amortised_gauss_net_forward.2} parent=1 // pred_fallthru
      _
    // Predicated region
    $region38: #{amortised_gauss_net_forward.2} parent=1 // pred_check
      _
    $region39: #{amortised_gauss_net_forward.2} parent=1 // pred_check_branch
      %76 = sbr.rel (0) target = $region41
    $region40: #{amortised_gauss_net_forward.2} parent=1 // pred_region
      %78 = dma.done [#allocation10], 1024
    $region41: #{amortised_gauss_net_forward.2} parent=1 // pred_fallthru
      _
    %s80 = sor.u32 255, 127
    %s81 = sand.u32 %s80, 85
    %s82 = sshrl.u32 %s81, 1
    %s83 = sor.u32 %s81, %s82
    %s84 = sand.u32 51, %s83
    %s85 = sshrl.u32 %s84, 2
    %s86 = sor.u32 %s84, %s85
    %s87 = sand.u32 15, %s86
    %v88 = vld [vmem:[%s6] sm:%s87]
    %v89 = vunpack.c.l.bf16 %v88
    %v90 = vunpack.c.h.bf16 %v88
    %v91 = vlaneseq
    %v92 = vand.u32 %v91, 127
    %vm94 = vcmp.lt.s32.totalorder %v92, 16
    %v95 = vsel %vm94, %v89, %v14
    %v96 = vpack.c.bf16 0.0, %v95
    %s98 = ssub.s32 16, 1
    %99 = vst [vmem:[#allocation12] sm:%s98] %v96
    %s100 = scalar_lea.vmem [#allocation12], 4
    %v101 = vpack.c.bf16 0.0, %v14
    %s103 = ssub.s32 16, 1
    %104 = vst [vmem:[%s100] sm:%s103] %v101
    %v105 = vld [vmem:[#allocation12] sm:$0xf]
    %v106 = vld [vmem:[#allocation12 + $0x4] sm:$0xf]
    %v107 = vld [vmem:[#allocation7] sm:$0xf]
    %v108 = vld [vmem:[#allocation7 + $0x4] sm:$0xf]
    %v109 = vld [vmem:[#allocation7 + $0x8] sm:$0xf]
    %v110 = vld [vmem:[#allocation7 + $0xc] sm:$0xf]
    %v111 = vld [vmem:[#allocation7 + $0x10] sm:$0xf]
    %v112 = vld [vmem:[#allocation7 + $0x14] sm:$0xf]
    %v113 = vld [vmem:[#allocation7 + $0x18] sm:$0xf]
    %v114 = vld [vmem:[#allocation7 + $0x1c] sm:$0xf]
    %v115 = vld [vmem:[#allocation7 + $0x20] sm:$0xf]
    %v116 = vld [vmem:[#allocation7 + $0x24] sm:$0xf]
    %v117 = vld [vmem:[#allocation7 + $0x28] sm:$0xf]
    %v118 = vld [vmem:[#allocation7 + $0x2c] sm:$0xf]
    %v119 = vld [vmem:[#allocation7 + $0x30] sm:$0xf]
    %v120 = vld [vmem:[#allocation7 + $0x34] sm:$0xf]
    %v121 = vld [vmem:[#allocation7 + $0x38] sm:$0xf]
    %v122 = vld [vmem:[#allocation7 + $0x3c] sm:$0xf]
    %v123 = vld [vmem:[%s1] sm:$0x1]
    %v125 = vperm.slane %v123, 0
    %v129 = vunpack.c.l.b16 %v105
    %v130 = vunpack.c.l.b16 %v106
    %v131 = vpack.c.b16 %v130, %v129
    %v149 = vunpack.c.l.b16 %v107
    %v150 = vunpack.c.l.b16 %v108
    %v151 = vunpack.c.l.b16 %v109
    %v152 = vunpack.c.l.b16 %v110
    %v153 = vunpack.c.l.b16 %v111
    %v154 = vunpack.c.l.b16 %v112
    %v155 = vunpack.c.l.b16 %v113
    %v156 = vunpack.c.l.b16 %v114
    %v157 = vunpack.c.l.b16 %v115
    %v158 = vunpack.c.l.b16 %v116
    %v159 = vunpack.c.l.b16 %v117
    %v160 = vunpack.c.l.b16 %v118
    %v161 = vunpack.c.l.b16 %v119
    %v162 = vunpack.c.l.b16 %v120
    %v163 = vunpack.c.l.b16 %v121
    %v164 = vunpack.c.l.b16 %v122
    %v165 = vpack.c.b16 %v150, %v149
    %v166 = vpack.c.b16 %v152, %v151
    %v167 = vpack.c.b16 %v154, %v153
    %v168 = vpack.c.b16 %v156, %v155
    %v169 = vpack.c.b16 %v158, %v157
    %v170 = vpack.c.b16 %v160, %v159
    %v171 = vpack.c.b16 %v162, %v161
    %v172 = vpack.c.b16 %v164, %v163
    %181 = vmatpush.bf16.msra.mxu0 %v172
    %182 = vmatpush.bf16.msra.mxu0 %v171
    %183 = vmatpush.bf16.msra.mxu0 %v170
    %184 = vmatpush.bf16.msra.mxu0 %v169
    %185 = vmatpush.bf16.msra.mxu0 %v168
    %186 = vmatpush.bf16.msra.mxu0 %v167
    %187 = vmatpush.bf16.msra.mxu0 %v166
    %188 = vmatpush.bf16.msra.mxu0 %v165
    %189 = vmatmul.bf16.gmra.mxu0 %v131
    %v190 = vpop.f32.mrf.mxu0
    %v191 = vadd.f32 %v125, %v190
    %v192 = vpop.f32.mrf.mxu0
    %v193 = vadd.f32 %v125, %v192
    %194 = vdwg.mxu0
    %v195 = vmax.f32 %v191, 0.0
    %v196 = vmax.f32 %v193, 0.0
    %v197 = vpack.c.bf16 %v196, %v195
    %v198 = vld [vmem:[#allocation9] sm:$0xf]
    %v199 = vld [vmem:[#allocation9 + $0x4] sm:$0xf]
    %v200 = vld [vmem:[#allocation9 + $0x8] sm:$0xf]
    %v201 = vld [vmem:[#allocation9 + $0xc] sm:$0xf]
    %v202 = vld [vmem:[#allocation9 + $0x10] sm:$0xf]
    %v203 = vld [vmem:[#allocation9 + $0x14] sm:$0xf]
    %v204 = vld [vmem:[#allocation9 + $0x18] sm:$0xf]
    %v205 = vld [vmem:[#allocation9 + $0x1c] sm:$0xf]
    %v206 = vld [vmem:[#allocation9 + $0x20] sm:$0xf]
    %v207 = vld [vmem:[#allocation9 + $0x24] sm:$0xf]
    %v208 = vld [vmem:[#allocation9 + $0x28] sm:$0xf]
    %v209 = vld [vmem:[#allocation9 + $0x2c] sm:$0xf]
    %v210 = vld [vmem:[#allocation9 + $0x30] sm:$0xf]
    %v211 = vld [vmem:[#allocation9 + $0x34] sm:$0xf]
    %v212 = vld [vmem:[#allocation9 + $0x38] sm:$0xf]
    %v213 = vld [vmem:[#allocation9 + $0x3c] sm:$0xf]
    %v214 = vld [vmem:[%s3] sm:$0x1]
    %v216 = vperm.slane %v214, 0
    %v234 = vunpack.c.l.b16 %v198
    %v235 = vunpack.c.l.b16 %v199
    %v236 = vunpack.c.l.b16 %v200
    %v237 = vunpack.c.l.b16 %v201
    %v238 = vunpack.c.l.b16 %v202
    %v239 = vunpack.c.l.b16 %v203
    %v240 = vunpack.c.l.b16 %v204
    %v241 = vunpack.c.l.b16 %v205
    %v242 = vunpack.c.l.b16 %v206
    %v243 = vunpack.c.l.b16 %v207
    %v244 = vunpack.c.l.b16 %v208
    %v245 = vunpack.c.l.b16 %v209
    %v246 = vunpack.c.l.b16 %v210
    %v247 = vunpack.c.l.b16 %v211
    %v248 = vunpack.c.l.b16 %v212
    %v249 = vunpack.c.l.b16 %v213
    %v250 = vpack.c.b16 %v235, %v234
    %v251 = vpack.c.b16 %v237, %v236
    %v252 = vpack.c.b16 %v239, %v238
    %v253 = vpack.c.b16 %v241, %v240
    %v254 = vpack.c.b16 %v243, %v242
    %v255 = vpack.c.b16 %v245, %v244
    %v256 = vpack.c.b16 %v247, %v246
    %v257 = vpack.c.b16 %v249, %v248
    %266 = vmatpush.bf16.msra.mxu0 %v257
    %267 = vmatpush.bf16.msra.mxu0 %v256
    %268 = vmatpush.bf16.msra.mxu0 %v255
    %269 = vmatpush.bf16.msra.mxu0 %v254
    %270 = vmatpush.bf16.msra.mxu0 %v253
    %271 = vmatpush.bf16.msra.mxu0 %v252
    %272 = vmatpush.bf16.msra.mxu0 %v251
    %273 = vmatpush.bf16.msra.mxu0 %v250
    %274 = vmatmul.bf16.gmra.mxu0 %v197
    %v275 = vpop.f32.mrf.mxu0
    %v276 = vadd.f32 %v216, %v275
    %v277 = vpop.f32.mrf.mxu0
    %v278 = vadd.f32 %v216, %v277
    %279 = vdwg.mxu0
    %v280 = vmax.f32 %v276, 0.0
    %v281 = vmax.f32 %v278, 0.0
    %v282 = vpack.c.bf16 %v281, %v280
    %v283 = vld [vmem:[#allocation11] sm:$0xf]
    %v284 = vld [vmem:[#allocation11 + $0x4] sm:$0xf]
    %v285 = vld [vmem:[#allocation11 + $0x8] sm:$0xf]
    %v286 = vld [vmem:[#allocation11 + $0xc] sm:$0xf]
    %v287 = vld [vmem:[#allocation11 + $0x10] sm:$0xf]
    %v288 = vld [vmem:[#allocation11 + $0x14] sm:$0xf]
    %v289 = vld [vmem:[#allocation11 + $0x18] sm:$0xf]
    %v290 = vld [vmem:[#allocation11 + $0x1c] sm:$0xf]
    %v291 = vld [vmem:[#allocation11 + $0x20] sm:$0xf]
    %v292 = vld [vmem:[#allocation11 + $0x24] sm:$0xf]
    %v293 = vld [vmem:[#allocation11 + $0x28] sm:$0xf]
    %v294 = vld [vmem:[#allocation11 + $0x2c] sm:$0xf]
    %v295 = vld [vmem:[#allocation11 + $0x30] sm:$0xf]
    %v296 = vld [vmem:[#allocation11 + $0x34] sm:$0xf]
    %v297 = vld [vmem:[#allocation11 + $0x38] sm:$0xf]
    %v298 = vld [vmem:[#allocation11 + $0x3c] sm:$0xf]
    %v299 = vld [vmem:[%s5] sm:$0x1]
    %v301 = vperm.slane %v299, 0
    %v319 = vunpack.c.l.b16 %v283
    %v320 = vunpack.c.l.b16 %v284
    %v321 = vunpack.c.l.b16 %v285
    %v322 = vunpack.c.l.b16 %v286
    %v323 = vunpack.c.l.b16 %v287
    %v324 = vunpack.c.l.b16 %v288
    %v325 = vunpack.c.l.b16 %v289
    %v326 = vunpack.c.l.b16 %v290
    %v327 = vunpack.c.l.b16 %v291
    %v328 = vunpack.c.l.b16 %v292
    %v329 = vunpack.c.l.b16 %v293
    %v330 = vunpack.c.l.b16 %v294
    %v331 = vunpack.c.l.b16 %v295
    %v332 = vunpack.c.l.b16 %v296
    %v333 = vunpack.c.l.b16 %v297
    %v334 = vunpack.c.l.b16 %v298
    %v335 = vpack.c.b16 %v320, %v319
    %v336 = vpack.c.b16 %v322, %v321
    %v337 = vpack.c.b16 %v324, %v323
    %v338 = vpack.c.b16 %v326, %v325
    %v339 = vpack.c.b16 %v328, %v327
    %v340 = vpack.c.b16 %v330, %v329
    %v341 = vpack.c.b16 %v332, %v331
    %v342 = vpack.c.b16 %v334, %v333
    %351 = vmatpush.bf16.msra.mxu0 %v342
    %352 = vmatpush.bf16.msra.mxu0 %v341
    %353 = vmatpush.bf16.msra.mxu0 %v340
    %354 = vmatpush.bf16.msra.mxu0 %v339
    %355 = vmatpush.bf16.msra.mxu0 %v338
    %356 = vmatpush.bf16.msra.mxu0 %v337
    %357 = vmatpush.bf16.msra.mxu0 %v336
    %358 = vmatpush.bf16.msra.mxu0 %v335
    %359 = vmatmul.bf16.gmra.mxu0 %v282
    %v360 = vpop.f32.mrf.mxu0
    %v361 = vadd.f32 %v301, %v360
    %v362 = vpop.f32.mrf.mxu0
    %v363 = vadd.f32 %v301, %v362
    %364 = vdwg.mxu0
    %vm365 = vcmp.gt.f32.partialorder %v361, 20.0
    %vm366 = vcmp.gt.f32.partialorder %v363, 20.0
    %v367 = vmin.f32 %v361, 20.0
    %v368 = vmin.f32 %v363, 20.0
    %v369 = vmul.f32 %v367, 1.442695
    %v370 = vpow.pop %v369
    %v371 = vmul.f32 %v368, 1.442695
    %v372 = vpow.pop %v371
    %v373 = vadd.f32 %v370, 1.0
    %v374 = vlog2.pop %v373
    %v375 = vmul.f32 %v374, 0.6931472
    %v376 = vmul.f32 -0.5, %v370
    %v377 = vadd.f32 %v376, 1.0
    %v378 = vmul.f32 %v377, %v370
    %v379 = vand.u32 2147483647, %v370
    %vm380 = vcmp.lt.f32.partialorder %v379, 0.0004427343
    %v381 = vsel %vm380, %v378, %v375
    %v382 = vadd.f32 %v372, 1.0
    %v383 = vlog2.pop %v382
    %v384 = vmul.f32 %v383, 0.6931472
    %v385 = vmul.f32 -0.5, %v372
    %v386 = vadd.f32 %v385, 1.0
    %v387 = vmul.f32 %v386, %v372
    %v388 = vand.u32 2147483647, %v372
    %vm389 = vcmp.lt.f32.partialorder %v388, 0.0004427343
    %v390 = vsel %vm389, %v387, %v384
    %v391 = vsel %vm365, %v361, %v381
    %v392 = vsel %vm366, %v363, %v390
    %v393 = vmax.f32 %v391, 0.006737947
    %v394 = vmax.f32 %v392, 0.006737947
    %v395 = vmin.f32 %v393, 7.389056
    %v396 = vmin.f32 %v394, 7.389056
    %v397 = vlaneseq
    %v398 = vand.u32 %v397, 127
    %vm399 = vcmp.ge.s32.totalorder %v398, 8
    %v400 = vsel %vm399, %v395, %v361
    %v401 = vsel %vm399, %v396, %v363
    %402 = vst [vmem:[%s8] sm:$0xff] %v400
    %403 = vst [vmem:[%s8 + $0x8] sm:$0xff] %v401
    // Predicated region
    $region42: #{amortised_gauss_net_forward.2} parent=1 // pred_check
      _
    $region43: #{amortised_gauss_net_forward.2} parent=1 // pred_check_branch
      %405 = sbr.rel (0) target = $region45
    $region44: #{amortised_gauss_net_forward.2} parent=1 // pred_region
      _
    $region45: #{amortised_gauss_net_forward.2} parent=1 // pred_fallthru
      _
    // Predicated region
    $region46: #{amortised_gauss_net_forward.2} parent=1 // pred_check
      _
    $region47: #{amortised_gauss_net_forward.2} parent=1 // pred_check_branch
      %407 = sbr.rel (0) target = $region49
    $region48: #{amortised_gauss_net_forward.2} parent=1 // pred_region
      _
    $region49: #{amortised_gauss_net_forward.2} parent=1 // pred_fallthru
      _
    %408 = vsyncpa [#allocation8], 1
    %409 = vsyncpa [#allocation10], 1

</llo_original>
